<compile_context>
chip_gen: v6e
topology: v6e:2x2x1
jax: 0.10.0
libtpu: 0.0.40
codegen_flags: <defaults>
</compile_context>

<pallas_src>
import jax
import jax.numpy as jnp
from jax import lax
from jax.experimental import pallas as pl
from jax.experimental.pallas import tpu as pltpu

POOL = 4  # nn.AvgPool2d(4)


def _vmem_capacity_bytes():
    try:
        return int(pltpu.get_tpu_info().vmem_capacity_bytes)
    except Exception:
        return 64 << 20  # conservative fallback (v7x-sized VMEM)


def _plan_tiles(C, H, W, esize, tile_h=None):
    """Pick the H-tile (TH) and a matching scoped-VMEM limit.

    Generation/dtype aware: the budget derives from the chip's physical VMEM and
    the real element size; accounting covers streamed input double-buffers, the
    resident pooling constants, the pooled-diff scratch and the output buffers.
    """
    Hp, Wp = H // POOL, W // POOL
    vmem_cap = _vmem_capacity_bytes()
    # ~3/8 of physical VMEM for this kernel, capped at 48 MiB:
    #   v5e/v6e (128 MiB) -> 48 MiB ;  v7x (64 MiB) -> 24 MiB.
    budget = min(vmem_cap * 3 // 8, 48 << 20)
    step = 16 if esize == 2 else 8  # sublane granularity (bf16 packs 2 rows/sublane)

    def total_bytes(th):
        thp = th // POOL
        stream = 2 * 2 * C * th * W * esize            # 2 inputs x 2 pipeline buffers
        consts = 2 * thp * (C * th) * esize + 2 * W * Wp * 4
        scratch = Hp * Wp * 4                          # pooled-diff carry
        out = 2 * Hp * Wp * 4                          # double-buffered output block
        return stream + consts + scratch + out

    if tile_h is None:
        cands = [d for d in range(step, H + 1, step) if H % d == 0]
        if not cands:
            cands = [H]  # awkward H: whole-image tile (block == full dim is legal)
        fitting = [d for d in cands if total_bytes(d) <= budget]
        th = max(fitting) if fitting else min(cands)
    else:
        th = tile_h

    vmem_limit = int(min(max(vmem_cap - (16 << 20), 16 << 20),
                         max(32 << 20, total_bytes(th) + (8 << 20))))
    return th, vmem_limit


def spatial_consistency_kernel(a_ch_ref, a_wT_ref, o_ref, e_ref, out_ref, dpool_ref):
    # a_ch_ref : (THp, C*TH) 0/1 fused channel-sum + 4-row-pool matrix (input dtype).
    # a_wT_ref : (W, Wp) 4-col-pool matrix with the 1/(C*16) scale folded in (f32).
    # o_ref / e_ref block: (1, C, TH, W).   out_ref block: (1, 1, Hp, Wp).
    # dpool_ref: VMEM scratch (Hp, Wp) carrying the pooled luminance diff across h.
    h = pl.program_id(1)
    n_h = pl.num_programs(1)
    _, C, TH, W = o_ref.shape
    THp = a_ch_ref.shape[0]
    Hp, Wp = dpool_ref.shape
    f32 = jnp.float32

    # Linearity: mean_C(o) - mean_C(e) == mean_C(o - e); one subtract on the slab.
    # Collapsing leading dims (C, TH, W) -> (C*TH, W) is layout-free.
    diff = (o_ref[0] - e_ref[0]).reshape(C * TH, W)          # streamed dtype (f32/bf16)

    # Fused channel reduction + 4-row pool on the MXU (0/1 matrix -> exact sums,
    # f32 accumulation), then the 4-col pool with the 1/(C*16) scale folded in.
    part = jnp.dot(a_ch_ref[...], diff, preferred_element_type=f32)     # (THp, W)
    pooled = jnp.dot(part, a_wT_ref[...], preferred_element_type=f32)   # (THp, Wp)

    # Aligned (unmasked) sublane store into the carry scratch.
    dpool_ref[pl.ds(pl.multiple_of(h * THp, THp), THp), :] = pooled

    # Directional gradients on the full pooled diff, once per image (last H step).
    @pl.when(h == n_h - 1)
    def _():
        p = dpool_ref[...]  # (Hp, Wp) f32
        row = lax.broadcasted_iota(jnp.int32, (Hp, Wp), 0)
        col = lax.broadcasted_iota(jnp.int32, (Hp, Wp), 1)
        zero = f32(0.0)

        def nbr(shift, axis, idx, boundary):
            # circular roll (XLU) + zero the wrapped row/col == conv zero padding
            n = pltpu.roll(p, shift=shift, axis=axis)
            return jnp.where(idx == boundary, zero, n)

        g_l = p - nbr(1, 1, col, 0)            # left : p[y,x] - p[y,x-1]
        g_r = p - nbr(Wp - 1, 1, col, Wp - 1)  # right: p[y,x] - p[y,x+1]
        g_u = p - nbr(1, 0, row, 0)            # up   : p[y,x] - p[y-1,x]
        g_d = p - nbr(Hp - 1, 0, row, Hp - 1)  # down : p[y,x] - p[y+1,x]

        out_ref[0, 0] = g_l * g_l + g_r * g_r + g_u * g_u + g_d * g_d


def spatial_consistency_loss(original, enhanced, tile_h=None, stream_bf16=False):
    """original, enhanced: (B, C, H, W) float32/bfloat16.  Returns (B, 1, H//4, W//4) f32.

    stream_bf16=True downcasts f32 inputs to bf16 before streaming (halves HBM
    bytes on this memory-bound kernel; ~1e-2 level accuracy).
    """
    B, C, H, W = original.shape
    assert enhanced.shape == original.shape
    assert H % POOL == 0 and W % POOL == 0
    Hp, Wp = H // POOL, W // POOL
    f32 = jnp.float32

    if stream_bf16:
        original = original.astype(jnp.bfloat16)
        enhanced = enhanced.astype(jnp.bfloat16)
    in_dtype = original.dtype
    esize = jnp.dtype(in_dtype).itemsize

    TH, vmem_limit = _plan_tiles(C, H, W, esize, tile_h=tile_h)
    assert H % TH == 0 and TH % POOL == 0 and (TH % 8 == 0 or TH == H)
    THp = TH // POOL
    n_h = H // TH

    # Constant pooling matrices, built once and kept resident in VMEM.
    #   a_ch[hp, c*TH + i] = 1            if i // 4 == hp  (channel sum + row pool)
    #   a_wT[j, wp]        = 1/(C*16)     if j // 4 == wp  (col pool + folded scale)
    i_idx = jnp.tile(jnp.arange(TH), C)                                   # (C*TH,)
    a_ch = (i_idx[None, :] // POOL == jnp.arange(THp)[:, None]).astype(in_dtype)
    a_wT = (jnp.arange(W)[:, None] // POOL == jnp.arange(Wp)[None, :]).astype(f32)
    a_wT = a_wT * f32(1.0 / (C * POOL * POOL))

    return pl.pallas_call(
        spatial_consistency_kernel,
        out_shape=jax.ShapeDtypeStruct((B, 1, Hp, Wp), f32),
        grid=(B, n_h),
        in_specs=[
            pl.BlockSpec((THp, C * TH), lambda b, h: (0, 0)),   # resident constants
            pl.BlockSpec((W, Wp), lambda b, h: (0, 0)),
            pl.BlockSpec((1, C, TH, W), lambda b, h: (b, 0, h, 0)),
            pl.BlockSpec((1, C, TH, W), lambda b, h: (b, 0, h, 0)),
        ],
        out_specs=pl.BlockSpec((1, 1, Hp, Wp), lambda b, h: (b, 0, 0, 0)),
        scratch_shapes=[pltpu.VMEM((Hp, Wp), f32)],
        compiler_params=pltpu.CompilerParams(
            dimension_semantics=("parallel", "arbitrary"),
            vmem_limit_bytes=vmem_limit),
    )(a_ch, a_wT, original, enhanced)


def _reference(original, enhanced):
    # Plain-JAX reference matching the PyTorch forward exactly.
    o_lum = jnp.mean(original.astype(jnp.float32), axis=1, keepdims=True)
    e_lum = jnp.mean(enhanced.astype(jnp.float32), axis=1, keepdims=True)

    def pool(x):
        B, _, H, W = x.shape
        return x.reshape(B, 1, H // POOL, POOL, W // POOL, POOL).mean(axis=(3, 5))

    o_p, e_p = pool(o_lum), pool(e_lum)

    def grad(p, dy, dx):
        pad = jnp.pad(p, ((0, 0), (0, 0), (1, 1), (1, 1)))
        nbr = pad[:, :, 1 + dy:1 + dy + p.shape[2], 1 + dx:1 + dx + p.shape[3]]
        return p - nbr

    total = 0.0
    for dy, dx in ((0, -1), (0, 1), (-1, 0), (1, 0)):  # left, right, up, down
        d = grad(o_p, dy, dx) - grad(e_p, dy, dx)
        total = total + d ** 2
    return total


if __name__ == "__main__":
    key = jax.random.PRNGKey(0)
    k1, k2, k3, k4 = jax.random.split(key, 4)

    # Case 1: small image, single H tile (matches the module's expected small shapes).
    original = jax.random.uniform(k1, (2, 4, 16, 16), dtype=jnp.float32)
    enhanced = jax.random.uniform(k2, (2, 4, 16, 16), dtype=jnp.float32)
    out = spatial_consistency_loss(original, enhanced)
    jax.block_until_ready(out)
    ref = _reference(original, enhanced)
    assert out.shape == (2, 1, 4, 4), out.shape
    assert jnp.allclose(out, ref, atol=1e-5, rtol=1e-5)

    # Case 2: force the tiled-H path (2 H tiles) to exercise the scratch carry.
    original2 = jax.random.uniform(k3, (1, 3, 64, 128), dtype=jnp.float32)
    enhanced2 = jax.random.uniform(k4, (1, 3, 64, 128), dtype=jnp.float32)
    out2 = spatial_consistency_loss(original2, enhanced2, tile_h=32)
    jax.block_until_ready(out2)
    ref2 = _reference(original2, enhanced2)
    assert out2.shape == (1, 1, 16, 32), out2.shape
    assert jnp.allclose(out2, ref2, atol=1e-5, rtol=1e-5)

    # Case 3: bf16 inputs streamed as-is (f32 accumulation on the MXU).
    out3 = spatial_consistency_loss(original.astype(jnp.bfloat16),
                                    enhanced.astype(jnp.bfloat16))
    jax.block_until_ready(out3)
    assert out3.shape == (2, 1, 4, 4)
    assert jnp.allclose(out3, ref, atol=5e-2)

    # Case 4: opt-in bf16 streaming of f32 inputs (halves HBM traffic).
    out4 = spatial_consistency_loss(original, enhanced, stream_bf16=True)
    jax.block_until_ready(out4)
    assert out4.shape == (2, 1, 4, 4)
    assert jnp.allclose(out4, ref, atol=5e-2)

    print("KERNEL_OK")
</pallas_src>

<mosaic_0001>
module attributes {stable_mosaic.version = 11 : i64} {
  func.func @spatial_consistency_kernel(%arg0: i32, %arg1: i32, %arg2: memref<4x64xf32, #tpu.memory_space<vmem>>, %arg3: memref<16x4xf32, #tpu.memory_space<vmem>>, %arg4: memref<1x4x16x16xf32, #tpu.memory_space<vmem>>, %arg5: memref<1x4x16x16xf32, #tpu.memory_space<vmem>>, %arg6: memref<1x1x4x4xf32, #tpu.memory_space<vmem>>, %arg7: memref<4x4xf32, #tpu.memory_space<vmem>>) attributes {dimension_semantics = [#tpu.dimension_semantics<parallel>, #tpu.dimension_semantics<arbitrary>], iteration_bounds = array<i64: 2, 1>, scalar_prefetch = 0 : i64, scratch_operands = 1 : i64, tpu.core_type = #tpu.core_type<tc>, window_params = [{pipeline_mode = #tpu.pipeline_mode<synchronous>, transform_indices = @transform_0, window_bounds = array<i64: 4, 64>}, {pipeline_mode = #tpu.pipeline_mode<synchronous>, transform_indices = @transform_1, window_bounds = array<i64: 16, 4>}, {transform_indices = @transform_2, window_bounds = array<i64: 1, 4, 16, 16>}, {transform_indices = @transform_3, window_bounds = array<i64: 1, 4, 16, 16>}, {transform_indices = @transform_4, window_bounds = array<i64: 1, 1, 4, 4>}]} {
    %c0 = arith.constant 0 : index
    %c0_0 = arith.constant 0 : index
    %c0_1 = arith.constant 0 : index
    %c0_2 = arith.constant 0 : index
    %0 = vector.load %arg4[%c0, %c0_0, %c0_1, %c0_2] : memref<1x4x16x16xf32, #tpu.memory_space<vmem>>, vector<1x4x16x16xf32>
    %1 = vector.shape_cast %0 : vector<1x4x16x16xf32> to vector<4x16x16xf32>
    %c0_3 = arith.constant 0 : index
    %c0_4 = arith.constant 0 : index
    %c0_5 = arith.constant 0 : index
    %c0_6 = arith.constant 0 : index
    %2 = vector.load %arg5[%c0_3, %c0_4, %c0_5, %c0_6] : memref<1x4x16x16xf32, #tpu.memory_space<vmem>>, vector<1x4x16x16xf32>
    %3 = vector.shape_cast %2 : vector<1x4x16x16xf32> to vector<4x16x16xf32>
    %4 = arith.subf %1, %3 : vector<4x16x16xf32>
    %5 = vector.shape_cast %4 : vector<4x16x16xf32> to vector<64x16xf32>
    %c0_7 = arith.constant 0 : index
    %c0_8 = arith.constant 0 : index
    %6 = vector.load %arg2[%c0_7, %c0_8] : memref<4x64xf32, #tpu.memory_space<vmem>>, vector<4x64xf32>
    %cst = arith.constant dense<0.000000e+00> : vector<4x16xf32>
    %7 = tpu.matmul %6, %5, %cst {dimension_numbers = #tpu.dot_dimension_numbers<[1], [0], [0], [1], [0, 0, 1, 1], [], []>} : vector<4x64xf32>, vector<64x16xf32>, vector<4x16xf32> -> vector<4x16xf32>
    %c0_9 = arith.constant 0 : index
    %c0_10 = arith.constant 0 : index
    %8 = vector.load %arg3[%c0_9, %c0_10] : memref<16x4xf32, #tpu.memory_space<vmem>>, vector<16x4xf32>
    %cst_11 = arith.constant dense<0.000000e+00> : vector<4x4xf32>
    %9 = tpu.matmul %7, %8, %cst_11 {dimension_numbers = #tpu.dot_dimension_numbers<[1], [0], [0], [1], [0, 0, 1, 1], [], []>} : vector<4x16xf32>, vector<16x4xf32>, vector<4x4xf32> -> vector<4x4xf32>
    %c4_i32 = arith.constant 4 : i32
    %10 = arith.muli %arg1, %c4_i32 : i32
    %11 = tpu.assume_multiple %10, 4 : i32
    %12 = arith.index_cast %11 : i32 to index
    %c0_12 = arith.constant 0 : index
    %13 = vector.load %arg7[%12, %c0_12] : memref<4x4xf32, #tpu.memory_space<vmem>>, vector<4x4xf32>
    tpu.vector_store %arg7[%12, %c0_12], %9 {strides = array<i32>} : memref<4x4xf32, #tpu.memory_space<vmem>>, vector<4x4xf32>,
    %c0_i32 = arith.constant 0 : i32
    %14 = arith.cmpi eq, %arg1, %c0_i32 : i32
    %15 = arith.extui %14 : i1 to i32
    %c0_i32_13 = arith.constant 0 : i32
    %16 = arith.cmpi ne, %15, %c0_i32_13 : i32
    scf.if %16 {
      %c0_14 = arith.constant 0 : index
      %c0_15 = arith.constant 0 : index
      %17 = vector.load %arg7[%c0_14, %c0_15] : memref<4x4xf32, #tpu.memory_space<vmem>>, vector<4x4xf32>
      %18 = tpu.iota {dimensions = array<i32: 0>} : vector<4x4xi32>
      %19 = tpu.iota {dimensions = array<i32: 1>} : vector<4x4xi32>
      %c1_i32 = arith.constant 1 : i32
      %20 = tpu.dynamic_rotate %17 by %c1_i32 dim 1 : vector<4x4xf32>, i32 -> vector<4x4xf32>
      %c0_i32_16 = arith.constant 0 : i32
      %21 = vector.broadcast %c0_i32_16 : i32 to vector<4x4xi32>
      %22 = arith.cmpi eq, %19, %21 : vector<4x4xi32>
      %cst_17 = arith.constant 0.000000e+00 : f32
      %23 = vector.broadcast %cst_17 : f32 to vector<4x4xf32>
      %24 = arith.select %22, %23, %20 : vector<4x4xi1>, vector<4x4xf32>
      %25 = arith.subf %17, %24 : vector<4x4xf32>
      %c3_i32 = arith.constant 3 : i32
      %26 = tpu.dynamic_rotate %17 by %c3_i32 dim 1 : vector<4x4xf32>, i32 -> vector<4x4xf32>
      %c3_i32_18 = arith.constant 3 : i32
      %27 = vector.broadcast %c3_i32_18 : i32 to vector<4x4xi32>
      %28 = arith.cmpi eq, %19, %27 : vector<4x4xi32>
      %cst_19 = arith.constant 0.000000e+00 : f32
      %29 = vector.broadcast %cst_19 : f32 to vector<4x4xf32>
      %30 = arith.select %28, %29, %26 : vector<4x4xi1>, vector<4x4xf32>
      %31 = arith.subf %17, %30 : vector<4x4xf32>
      %c1_i32_20 = arith.constant 1 : i32
      %32 = tpu.dynamic_rotate %17 by %c1_i32_20 dim 0 : vector<4x4xf32>, i32 -> vector<4x4xf32>
      %c0_i32_21 = arith.constant 0 : i32
      %33 = vector.broadcast %c0_i32_21 : i32 to vector<4x4xi32>
      %34 = arith.cmpi eq, %18, %33 : vector<4x4xi32>
      %cst_22 = arith.constant 0.000000e+00 : f32
      %35 = vector.broadcast %cst_22 : f32 to vector<4x4xf32>
      %36 = arith.select %34, %35, %32 : vector<4x4xi1>, vector<4x4xf32>
      %37 = arith.subf %17, %36 : vector<4x4xf32>
      %c3_i32_23 = arith.constant 3 : i32
      %38 = tpu.dynamic_rotate %17 by %c3_i32_23 dim 0 : vector<4x4xf32>, i32 -> vector<4x4xf32>
      %c3_i32_24 = arith.constant 3 : i32
      %39 = vector.broadcast %c3_i32_24 : i32 to vector<4x4xi32>
      %40 = arith.cmpi eq, %18, %39 : vector<4x4xi32>
      %cst_25 = arith.constant 0.000000e+00 : f32
      %41 = vector.broadcast %cst_25 : f32 to vector<4x4xf32>
      %42 = arith.select %40, %41, %38 : vector<4x4xi1>, vector<4x4xf32>
      %43 = arith.subf %17, %42 : vector<4x4xf32>
      %44 = arith.mulf %25, %25 : vector<4x4xf32>
      %45 = arith.mulf %31, %31 : vector<4x4xf32>
      %46 = arith.addf %44, %45 : vector<4x4xf32>
      %47 = arith.mulf %37, %37 : vector<4x4xf32>
      %48 = arith.addf %46, %47 : vector<4x4xf32>
      %49 = arith.mulf %43, %43 : vector<4x4xf32>
      %50 = arith.addf %48, %49 : vector<4x4xf32>
      %c0_26 = arith.constant 0 : index
      %c0_27 = arith.constant 0 : index
      %c0_28 = arith.constant 0 : index
      %c0_29 = arith.constant 0 : index
      %51 = vector.load %arg6[%c0_26, %c0_27, %c0_28, %c0_29] : memref<1x1x4x4xf32, #tpu.memory_space<vmem>>, vector<1x1x4x4xf32>
      %52 = vector.shape_cast %51 : vector<1x1x4x4xf32> to vector<4x4xf32>
      %53 = vector.shape_cast %50 : vector<4x4xf32> to vector<1x1x4x4xf32>
      tpu.vector_store %arg6[%c0_26, %c0_27, %c0_28, %c0_29], %53 {strides = array<i32>} : memref<1x1x4x4xf32, #tpu.memory_space<vmem>>, vector<1x1x4x4xf32>,
    } else {
    }
    return
  }
  func.func @transform_0(%arg0: i32, %arg1: i32) -> (i32, i32) {
    %c0_i32 = arith.constant 0 : i32
    %c0_i32_0 = arith.constant 0 : i32
    %c0_i32_1 = arith.constant 0 : i32
    return %c0_i32, %c0_i32_0 : i32, i32
  }
  func.func @transform_1(%arg0: i32, %arg1: i32) -> (i32, i32) {
    %c0_i32 = arith.constant 0 : i32
    %c0_i32_0 = arith.constant 0 : i32
    %c0_i32_1 = arith.constant 0 : i32
    return %c0_i32, %c0_i32_0 : i32, i32
  }
  func.func @transform_2(%arg0: i32, %arg1: i32) -> (i32, i32, i32, i32) {
    %c0_i32 = arith.constant 0 : i32
    %c0_i32_0 = arith.constant 0 : i32
    %c0_i32_1 = arith.constant 0 : i32
    return %arg0, %c0_i32, %arg1, %c0_i32_0 : i32, i32, i32, i32
  }
  func.func @transform_3(%arg0: i32, %arg1: i32) -> (i32, i32, i32, i32) {
    %c0_i32 = arith.constant 0 : i32
    %c0_i32_0 = arith.constant 0 : i32
    %c0_i32_1 = arith.constant 0 : i32
    return %arg0, %c0_i32, %arg1, %c0_i32_0 : i32, i32, i32, i32
  }
  func.func @transform_4(%arg0: i32, %arg1: i32) -> (i32, i32, i32, i32) {
    %c0_i32 = arith.constant 0 : i32
    %c0_i32_0 = arith.constant 0 : i32
    %c0_i32_1 = arith.constant 0 : i32
    %c0_i32_2 = arith.constant 0 : i32
    return %arg0, %c0_i32, %c0_i32_0, %c0_i32_1 : i32, i32, i32, i32
  }
}

</mosaic_0001>

<llo_original>
// kernel: tpu_custom_call.1
$region0: #{tpu_custom_call.1}
  #allocation0 [shape = 'u32[]', space=smem, size = 0x4, offset = 0x4, fixed_abs, tag = 'smem constant byte address 0x4 - core index']
  #allocation1 [shape = 'u32[144,128]{1,0:T(1,128)}', space=vmem, size = 0x12000, scoped, tag = 'internal scratch']
  #allocation2 [shape = 'f32[4,4]{1,0:T(4,128)}', space=vmem, size = 0x800, scoped, tag = 'scratch operand']
  %s0 = inlined_call_operand.vmem [shape: f32[4,64], index: 0, kind: input, shape index: {}]
  %s1 = inlined_call_operand.vmem [shape: f32[16,4], index: 1, kind: input, shape index: {}]
  %s2 = inlined_call_operand.hbm [shape: f32[2,4,16,16], index: 2, kind: input, shape index: {}]
  %s3 = inlined_call_operand.hbm [shape: f32[2,4,16,16], index: 3, kind: input, shape index: {}]
  %s4 = inlined_call_operand.hbm [shape: f32[2,1,4,4], index: 4, kind: output, shape index: {}]
  %s5 = sld [smem:[#allocation0]]
  $region61: #{tpu_custom_call.1} parent=0
    _
  %s7 = ssub.s32 1, %s5
  %s8 = scalar_select 0, %s7, %s5
  $region1: #{tpu_custom_call.1} parent=0
    #allocation3 [shape = 'u8[65536]{0}', space=vmem, size = 0x10000, scoped, tag = 'input window, operand 2']
    #allocation4 [shape = 's32[2]{0}', space=sflag, size = 0x8, scoped, tag = 'scoped memory for tpu_custom_call.1']
    #allocation5 [shape = 's32[2]{0}', space=sflag, size = 0x8, scoped, tag = 'scoped memory for tpu_custom_call.1']
    #allocation6 [shape = 'u8[65536]{0}', space=vmem, size = 0x10000, scoped, tag = 'input window, operand 3']
    #allocation7 [shape = 's32[2]{0}', space=sflag, size = 0x8, scoped, tag = 'scoped memory for tpu_custom_call.1']
    #allocation8 [shape = 'u8[4096]{0}', space=vmem, size = 0x1000, scoped, tag = 'output window, operand 0']
    %9 = vsyncpa [#allocation4], 0
    %s10 = scalar_lea.sflag [#allocation4], 1
    %11 = vsyncpa %s10, 0
    %12 = vsyncpa [#allocation7], 0
    %s13 = scalar_lea.sflag [#allocation7], 1
    %14 = vsyncpa %s13, 0
    %15 = vsyncpa [#allocation5], 0
    %s16 = scalar_lea.sflag [#allocation5], 1
    %17 = vsyncpa %s16, 0
    loop: start=0, step=1, limit=4
    $region2: #{tpu_custom_call.1} parent=1 // loop_pre_header
      _
    $region3: #{tpu_custom_call.1} parent=1 // loop_header
      %s19 = sphi 0, %s23
      %p20 = scmp.ge.s32.totalorder %s19, 4
      %s26 = sphi 0, %s38
      %s27 = sphi 0, %s34
      %s28 = sphi 0, %s26
      %s29 = sphi 0, %s27
      %s30 = sphi 0, %s28
      %s31 = sphi 0, %s29
      %s39 = sphi 0, %s39
      %s41 = sphi 0, %s39
      %s42 = sphi 0, %s41
      %s56 = sphi 0, %s42
      %s60 = sphi 0, %s60
      %s62 = sphi 0, %s60
      %s63 = sphi 0, %s62
      %s77 = sphi 0, %s63
      %s85 = sphi 0, %s87
      %s88 = sphi 0, %s85
      %s89 = sphi 0, %s88
      %s105 = sphi 0, %s89
      %s113 = sphi 0, %s115
      %s116 = sphi 0, %s113
      %s117 = sphi 0, %s116
      %s133 = sphi 0, %s117
      %s139 = sphi 0, %s141
      %s142 = sphi 0, %s139
      %s143 = sphi 0, %s142
      %s159 = sphi 0, %s143
    $region4: #{tpu_custom_call.1} parent=1 // loop_header_branch
      %22 = sbr.rel (%p20) target = $region8
    $region5: #{tpu_custom_call.1} parent=1 // loop_body
      %s24 = ssub.s32 %s19, 1
      %s25 = ssub.s32 %s19, 2
      %s32 = sadd.s32 1, %s27
      %p33 = scmp.ge.s32.totalorder %s32, 1
      %s34 = scalar_select %p33, 0, %s32
      %s35 = sadd.s32 1, %s26
      %s36 = scalar_select %p33, %s35, %s26
      %p37 = scmp.ge.s32.totalorder %s36, 2
      %s38 = scalar_select %p37, 0, %s36
      %s40 = sadd.s32 %s39, 1
      %p43 = scmp.eq.s32.totalorder %s19, 1
      %p44 = scmp.ne.s32.totalorder %s39, %s41
      %p45 = scmp.eq.s32.totalorder %s19, 0
      %p46 = por %p44, %p45
      %p47 = scmp.ne.s32.totalorder %s39, %s41
      %p48 = scmp.eq.s32.totalorder %s24, 1
      %p49 = por %p47, %p48
      %p50 = scmp.ne.s32.totalorder %s41, %s42
      %p51 = scmp.eq.s32.totalorder %s24, 0
      %p52 = por %p50, %p51
      %p53 = scmp.ne.s32.totalorder %s41, %s42
      %p54 = scmp.eq.s32.totalorder %s25, 1
      %p55 = por %p53, %p54
      %p57 = scmp.ne.s32.totalorder %s42, %s56
      %p58 = scmp.eq.s32.totalorder %s25, 0
      %p59 = por %p57, %p58
      %s61 = sadd.s32 %s60, 1
      %p64 = scmp.eq.s32.totalorder %s19, 1
      %p65 = scmp.ne.s32.totalorder %s60, %s62
      %p66 = scmp.eq.s32.totalorder %s19, 0
      %p67 = por %p65, %p66
      %p68 = scmp.ne.s32.totalorder %s60, %s62
      %p69 = scmp.eq.s32.totalorder %s24, 1
      %p70 = por %p68, %p69
      %p71 = scmp.ne.s32.totalorder %s62, %s63
      %p72 = scmp.eq.s32.totalorder %s24, 0
      %p73 = por %p71, %p72
      %p74 = scmp.ne.s32.totalorder %s62, %s63
      %p75 = scmp.eq.s32.totalorder %s25, 1
      %p76 = por %p74, %p75
      %p78 = scmp.ne.s32.totalorder %s63, %s77
      %p79 = scmp.eq.s32.totalorder %s25, 0
      %p80 = por %p78, %p79
      %s81 = ssub.s32 %s26, %s38
      %s82 = ssub.s32 %s27, %s34
      %s83 = sor.u32 %s81, %s82
      %p84 = scmp.eq.s32.totalorder %s83, 0
      %s86 = sadd.s32 %s85, 1
      %s87 = scalar_select %p84, %s85, %s86
      %p90 = pneg %p84
      %p91 = scmp.eq.s32.totalorder %s19, 1
      %p92 = por %p90, %p91
      %p93 = scmp.ne.s32.totalorder %s85, %s88
      %p94 = scmp.eq.s32.totalorder %s19, 0
      %p95 = por %p93, %p94
      %p96 = scmp.ne.s32.totalorder %s85, %s88
      %p97 = scmp.eq.s32.totalorder %s24, 1
      %p98 = por %p96, %p97
      %p99 = scmp.ne.s32.totalorder %s88, %s89
      %p100 = scmp.eq.s32.totalorder %s24, 0
      %p101 = por %p99, %p100
      %p102 = scmp.ne.s32.totalorder %s88, %s89
      %p103 = scmp.eq.s32.totalorder %s25, 1
      %p104 = por %p102, %p103
      %p106 = scmp.ne.s32.totalorder %s89, %s105
      %p107 = scmp.eq.s32.totalorder %s25, 0
      %p108 = por %p106, %p107
      %s109 = ssub.s32 %s26, %s38
      %s110 = ssub.s32 %s27, %s34
      %s111 = sor.u32 %s109, %s110
      %p112 = scmp.eq.s32.totalorder %s111, 0
      %s114 = sadd.s32 %s113, 1
      %s115 = scalar_select %p112, %s113, %s114
      %p118 = pneg %p112
      %p119 = scmp.eq.s32.totalorder %s19, 1
      %p120 = por %p118, %p119
      %p121 = scmp.ne.s32.totalorder %s113, %s116
      %p122 = scmp.eq.s32.totalorder %s19, 0
      %p123 = por %p121, %p122
      %p124 = scmp.ne.s32.totalorder %s113, %s116
      %p125 = scmp.eq.s32.totalorder %s24, 1
      %p126 = por %p124, %p125
      %p127 = scmp.ne.s32.totalorder %s116, %s117
      %p128 = scmp.eq.s32.totalorder %s24, 0
      %p129 = por %p127, %p128
      %p130 = scmp.ne.s32.totalorder %s116, %s117
      %p131 = scmp.eq.s32.totalorder %s25, 1
      %p132 = por %p130, %p131
      %p134 = scmp.ne.s32.totalorder %s117, %s133
      %p135 = scmp.eq.s32.totalorder %s25, 0
      %p136 = por %p134, %p135
      %s137 = ssub.s32 %s26, %s38
      %p138 = scmp.eq.s32.totalorder %s137, 0
      %s140 = sadd.s32 %s139, 1
      %s141 = scalar_select %p138, %s139, %s140
      %p144 = pneg %p138
      %p145 = scmp.eq.s32.totalorder %s19, 1
      %p146 = por %p144, %p145
      %p147 = scmp.ne.s32.totalorder %s139, %s142
      %p148 = scmp.eq.s32.totalorder %s19, 0
      %p149 = por %p147, %p148
      %p150 = scmp.ne.s32.totalorder %s139, %s142
      %p151 = scmp.eq.s32.totalorder %s24, 1
      %p152 = por %p150, %p151
      %p153 = scmp.ne.s32.totalorder %s142, %s143
      %p154 = scmp.eq.s32.totalorder %s24, 0
      %p155 = por %p153, %p154
      %p156 = scmp.ne.s32.totalorder %s142, %s143
      %p157 = scmp.eq.s32.totalorder %s25, 1
      %p158 = por %p156, %p157
      %p160 = scmp.ne.s32.totalorder %s143, %s159
      %p161 = scmp.eq.s32.totalorder %s25, 0
      %p162 = por %p160, %p161
      %p163 = scmp.le.s32.totalorder 1, %s19
      %p164 = scmp.lt.s32.totalorder %s19, 3
      %p165 = pnand %p163, %p164
      %p166 = pneg %p165
      // Predicated region
      $region9: #{tpu_custom_call.1} parent=5 // pred_check
        _
      $region10: #{tpu_custom_call.1} parent=5 // pred_check_branch
        %168 = sbr.rel (%p165) target = $region12
      $region11: #{tpu_custom_call.1} parent=5 // pred_region
        %s169 = ssub.s32 %s19, 1
        // Predicated region
        $region13: #{tpu_custom_call.1} parent=11 // pred_check
          %p170 = pneg %p52
        $region14: #{tpu_custom_call.1} parent=11 // pred_check_branch
          %172 = sbr.rel (%p170) target = $region16
        $region15: #{tpu_custom_call.1} parent=11 // pred_region
          _
        $region16: #{tpu_custom_call.1} parent=11 // pred_fallthru
          _
        // Predicated region
        $region17: #{tpu_custom_call.1} parent=11 // pred_check
          %p173 = pneg %p73
        $region18: #{tpu_custom_call.1} parent=11 // pred_check_branch
          %175 = sbr.rel (%p173) target = $region20
        $region19: #{tpu_custom_call.1} parent=11 // pred_region
          _
        $region20: #{tpu_custom_call.1} parent=11 // pred_fallthru
          _
      $region12: #{tpu_custom_call.1} parent=5 // pred_fallthru
        _
      %p176 = scmp.lt.s32.totalorder %s19, 2
      // Predicated region
      $region21: #{tpu_custom_call.1} parent=5 // pred_check
        %p177 = pneg %p176
      $region22: #{tpu_custom_call.1} parent=5 // pred_check_branch
        %179 = sbr.rel (%p177) target = $region24
      $region23: #{tpu_custom_call.1} parent=5 // pred_region
        // Predicated region
        $region25: #{tpu_custom_call.1} parent=23 // pred_check
          %p180 = pneg %p95
        $region26: #{tpu_custom_call.1} parent=23 // pred_check_branch
          %182 = sbr.rel (%p180) target = $region28
        $region27: #{tpu_custom_call.1} parent=23 // pred_region
          %s183 = sand.u32 %s85, 1
          %s184 = scalar_lea.sflag [#allocation4], %s183
          %s185 = sand.u32 %s85, 1
          %s186 = smul.addr %s185, 64
          %s187 = scalar_lea.vmem [#allocation3], %s186
          %s188 = smul.u32 2, %s27
          %s190 = ssub.s32 1024, 1024
          %191 = vsyncadd %s184, %s190
          %s192 = smul.addr %s26, 8
          %s193 = sadd.s32 %s188, %s192
          %s194 = smul.addr %s193, 128
          %s195 = scalar_lea.hbm %s2, %s194
          %s196 = sshll.u32 %s187, 4
          %s197 = int_to_ptr.vmem [resolvable:$true] %s196
          %202 = dma.hbm_to_vmem [thread:$0]  %s195, 1024, %s197, %s184, 128, 128, 8
        $region28: #{tpu_custom_call.1} parent=23 // pred_fallthru
          _
        // Predicated region
        $region29: #{tpu_custom_call.1} parent=23 // pred_check
          %p203 = pneg %p123
        $region30: #{tpu_custom_call.1} parent=23 // pred_check_branch
          %205 = sbr.rel (%p203) target = $region32
        $region31: #{tpu_custom_call.1} parent=23 // pred_region
          %s206 = sand.u32 %s113, 1
          %s207 = scalar_lea.sflag [#allocation7], %s206
          %s208 = sand.u32 %s113, 1
          %s209 = smul.addr %s208, 64
          %s210 = scalar_lea.vmem [#allocation6], %s209
          %s211 = smul.u32 2, %s27
          %s213 = ssub.s32 1024, 1024
          %214 = vsyncadd %s207, %s213
          %s215 = smul.addr %s26, 8
          %s216 = sadd.s32 %s211, %s215
          %s217 = smul.addr %s216, 128
          %s218 = scalar_lea.hbm %s3, %s217
          %s219 = sshll.u32 %s210, 4
          %s220 = int_to_ptr.vmem [resolvable:$true] %s219
          %225 = dma.hbm_to_vmem [thread:$0]  %s218, 1024, %s220, %s207, 128, 128, 8
        $region32: #{tpu_custom_call.1} parent=23 // pred_fallthru
          _
      $region24: #{tpu_custom_call.1} parent=5 // pred_fallthru
        _
      %p226 = scmp.le.s32.totalorder 1, %s19
      %p227 = scmp.lt.s32.totalorder %s19, 3
      %p228 = pnand %p226, %p227
      %p229 = pneg %p228
      // Predicated region
      $region33: #{tpu_custom_call.1} parent=5 // pred_check
        _
      $region34: #{tpu_custom_call.1} parent=5 // pred_check_branch
        %231 = sbr.rel (%p228) target = $region36
      $region35: #{tpu_custom_call.1} parent=5 // pred_region
        %s232 = ssub.s32 %s19, 1
        %s233 = sand.u32 %s88, 1
        %s234 = scalar_lea.sflag [#allocation4], %s233
        %s235 = sand.u32 %s88, 1
        %s236 = smul.addr %s235, 64
        %s237 = scalar_lea.vmem [#allocation3], %s236
        // Predicated region
        $region37: #{tpu_custom_call.1} parent=35 // pred_check
          %p238 = pneg %p101
        $region38: #{tpu_custom_call.1} parent=35 // pred_check_branch
          %240 = sbr.rel (%p238) target = $region40
        $region39: #{tpu_custom_call.1} parent=35 // pred_region
          %241 = dma.done %s234, 1024
        $region40: #{tpu_custom_call.1} parent=35 // pred_fallthru
          _
        %s242 = sand.u32 %s116, 1
        %s243 = scalar_lea.sflag [#allocation7], %s242
        %s244 = sand.u32 %s116, 1
        %s245 = smul.addr %s244, 64
        %s246 = scalar_lea.vmem [#allocation6], %s245
        // Predicated region
        $region41: #{tpu_custom_call.1} parent=35 // pred_check
          %p247 = pneg %p129
        $region42: #{tpu_custom_call.1} parent=35 // pred_check_branch
          %249 = sbr.rel (%p247) target = $region44
        $region43: #{tpu_custom_call.1} parent=35 // pred_region
          %250 = dma.done %s243, 1024
        $region44: #{tpu_custom_call.1} parent=35 // pred_fallthru
          _
        %p251 = pneg %p52
        %p252 = pneg %p49
        %p253 = pneg %p73
        %p254 = pneg %p70
        %s255 = sand.u32 %s88, 1
        %s256 = scalar_lea.sflag [#allocation4], %s255
        %s257 = sand.u32 %s88, 1
        %s258 = smul.addr %s257, 64
        %s259 = scalar_lea.vmem [#allocation3], %s258
        %p260 = pneg %p101
        %p261 = pneg %p98
        %s262 = sand.u32 %s116, 1
        %s263 = scalar_lea.sflag [#allocation7], %s262
        %s264 = sand.u32 %s116, 1
        %s265 = smul.addr %s264, 64
        %s266 = scalar_lea.vmem [#allocation6], %s265
        %p267 = pneg %p129
        %p268 = pneg %p126
        %p269 = pneg %p155
        %p270 = pneg %p152
        %s271 = sand.u32 %s142, 1
        %s272 = scalar_lea.sflag [#allocation5], %s271
        %s273 = sand.u32 %s142, 1
        %s274 = smul.addr %s273, 4
        %s275 = scalar_lea.vmem [#allocation8], %s274
        %s276 = smul.u32 2, %s29
        %s277 = smul.u32 2, %s29
        %v278 = vld [vmem:[%s237] sm:$0xff]
        %v279 = vld [vmem:[%s237 + $0x8] sm:$0xff]
        %v280 = vld [vmem:[%s237 + $0x10] sm:$0xff]
        %v281 = vld [vmem:[%s237 + $0x18] sm:$0xff]
        %v282 = vld [vmem:[%s237 + $0x20] sm:$0xff]
        %v283 = vld [vmem:[%s237 + $0x28] sm:$0xff]
        %v284 = vld [vmem:[%s237 + $0x30] sm:$0xff]
        %v285 = vld [vmem:[%s237 + $0x38] sm:$0xff]
        %v286 = vld [vmem:[%s246] sm:$0xff]
        %v287 = vld [vmem:[%s246 + $0x8] sm:$0xff]
        %v288 = vld [vmem:[%s246 + $0x10] sm:$0xff]
        %v289 = vld [vmem:[%s246 + $0x18] sm:$0xff]
        %v290 = vld [vmem:[%s246 + $0x20] sm:$0xff]
        %v291 = vld [vmem:[%s246 + $0x28] sm:$0xff]
        %v292 = vld [vmem:[%s246 + $0x30] sm:$0xff]
        %v293 = vld [vmem:[%s246 + $0x38] sm:$0xff]
        %v294 = vsub.f32 %v278, %v286
        %v295 = vsub.f32 %v279, %v287
        %v296 = vsub.f32 %v280, %v288
        %v297 = vsub.f32 %v281, %v289
        %v298 = vsub.f32 %v282, %v290
        %v299 = vsub.f32 %v283, %v291
        %v300 = vsub.f32 %v284, %v292
        %v301 = vsub.f32 %v285, %v293
        %v302 = vld [vmem:[%s0] sm:$0xf]
        %vm303 = vcmask 523264
        %v305 = vsel %vm303, %v302, 0
        %307 = vmatprep.subr.mxu0 0.0
        %308 = vmatpush1.msra.mxu0 0.0
        %309 = vmatprep.subr.mxu0 0.0
        %310 = vmatpush1.msra.mxu0 0.0
        %311 = vmatprep.subr.mxu0 0.0
        %312 = vmatpush1.msra.mxu0 0.0
        %313 = vmatprep.subr.mxu0 0.0
        %314 = vmatpush1.msra.mxu0 0.0
        %315 = vmatprep.subr.mxu0 0.0
        %316 = vmatpush1.msra.mxu0 0.0
        %317 = vmatprep.subr.mxu0 0.0
        %318 = vmatpush1.msra.mxu0 0.0
        %319 = vmatprep.subr.mxu0 0.0
        %320 = vmatpush1.msra.mxu0 0.0
        %321 = vmatprep.subr.mxu0 0.0
        %322 = vmatpush1.msra.mxu0 0.0
        %323 = vmatprep.subr.mxu0 0.0
        %324 = vmatpush1.msra.mxu0 %v301
        %325 = vmatprep.subr.mxu0 0.0
        %326 = vmatpush1.msra.mxu0 %v300
        %327 = vmatprep.subr.mxu0 0.0
        %328 = vmatpush1.msra.mxu0 %v299
        %329 = vmatprep.subr.mxu0 0.0
        %330 = vmatpush1.msra.mxu0 %v298
        %331 = vmatprep.subr.mxu0 0.0
        %332 = vmatpush1.msra.mxu0 %v297
        %333 = vmatprep.subr.mxu0 0.0
        %334 = vmatpush1.msra.mxu0 %v296
        %335 = vmatprep.subr.mxu0 0.0
        %336 = vmatpush1.msra.mxu0 %v295
        %337 = vmatprep.subr.mxu0 0.0
        %338 = vmatpush1.msra.mxu0 %v294
        %339 = vmatprep.subr.mxu0 0.0
        %340 = vmatpush2.msra.mxu0 0.0
        %341 = vmatprep.subr.mxu0 0.0
        %342 = vmatpush2.msra.mxu0 0.0
        %343 = vmatprep.subr.mxu0 0.0
        %344 = vmatpush2.msra.mxu0 0.0
        %345 = vmatprep.subr.mxu0 0.0
        %346 = vmatpush2.msra.mxu0 0.0
        %347 = vmatprep.subr.mxu0 0.0
        %348 = vmatpush2.msra.mxu0 0.0
        %349 = vmatprep.subr.mxu0 0.0
        %350 = vmatpush2.msra.mxu0 0.0
        %351 = vmatprep.subr.mxu0 0.0
        %352 = vmatpush2.msra.mxu0 0.0
        %353 = vmatprep.subr.mxu0 0.0
        %354 = vmatpush2.msra.mxu0 0.0
        %355 = vmatprep.subr.mxu0 0.0
        %356 = vmatpush2.msra.mxu0 0.0
        %357 = vmatprep.subr.mxu0 0.0
        %358 = vmatpush2.msra.mxu0 0.0
        %359 = vmatprep.subr.mxu0 0.0
        %360 = vmatpush2.msra.mxu0 0.0
        %361 = vmatprep.subr.mxu0 0.0
        %362 = vmatpush2.msra.mxu0 0.0
        %363 = vmatprep.subr.mxu0 0.0
        %364 = vmatpush2.msra.mxu0 0.0
        %365 = vmatprep.subr.mxu0 0.0
        %366 = vmatpush2.msra.mxu0 0.0
        %367 = vmatprep.subr.mxu0 0.0
        %368 = vmatpush2.msra.mxu0 0.0
        %369 = vmatprep.subr.mxu0 0.0
        %370 = vmatpush2.msra.mxu0 0.0
        %371 = vmatprep.mubr.f32.mxu0 0.0
        %372 = vmatmul.mubr.f32.gmra.mxu0 %v305
        %v373 = vpop.f32.mrf.mxu0
        %v374 = vadd.f32 0.0, %v373
        %v375 = vpop.f32.mrf.mxu0
        %376 = vdwg.mxu0
        %v377 = vld [vmem:[%s1] sm:$0xff]
        %v378 = vld [vmem:[%s1 + $0x8] sm:$0xff]
        %vm379 = vcmask 130048
        %v381 = vsel %vm379, %v374, 0
        %383 = vmatprep.subr.mxu0 0.0
        %384 = vmatpush1.msra.mxu0 0.0
        %385 = vmatprep.subr.mxu0 0.0
        %386 = vmatpush1.msra.mxu0 0.0
        %387 = vmatprep.subr.mxu0 0.0
        %388 = vmatpush1.msra.mxu0 0.0
        %389 = vmatprep.subr.mxu0 0.0
        %390 = vmatpush1.msra.mxu0 0.0
        %391 = vmatprep.subr.mxu0 0.0
        %392 = vmatpush1.msra.mxu0 0.0
        %393 = vmatprep.subr.mxu0 0.0
        %394 = vmatpush1.msra.mxu0 0.0
        %395 = vmatprep.subr.mxu0 0.0
        %396 = vmatpush1.msra.mxu0 0.0
        %397 = vmatprep.subr.mxu0 0.0
        %398 = vmatpush1.msra.mxu0 0.0
        %399 = vmatprep.subr.mxu0 0.0
        %400 = vmatpush1.msra.mxu0 0.0
        %401 = vmatprep.subr.mxu0 0.0
        %402 = vmatpush1.msra.mxu0 0.0
        %403 = vmatprep.subr.mxu0 0.0
        %404 = vmatpush1.msra.mxu0 0.0
        %405 = vmatprep.subr.mxu0 0.0
        %406 = vmatpush1.msra.mxu0 0.0
        %407 = vmatprep.subr.mxu0 0.0
        %408 = vmatpush1.msra.mxu0 0.0
        %409 = vmatprep.subr.mxu0 0.0
        %410 = vmatpush1.msra.mxu0 0.0
        %411 = vmatprep.subr.mxu0 0.0
        %412 = vmatpush1.msra.mxu0 %v378
        %413 = vmatprep.subr.mxu0 0.0
        %414 = vmatpush1.msra.mxu0 %v377
        %415 = vmatprep.subr.mxu0 0.0
        %416 = vmatpush2.msra.mxu0 0.0
        %417 = vmatprep.subr.mxu0 0.0
        %418 = vmatpush2.msra.mxu0 0.0
        %419 = vmatprep.subr.mxu0 0.0
        %420 = vmatpush2.msra.mxu0 0.0
        %421 = vmatprep.subr.mxu0 0.0
        %422 = vmatpush2.msra.mxu0 0.0
        %423 = vmatprep.subr.mxu0 0.0
        %424 = vmatpush2.msra.mxu0 0.0
        %425 = vmatprep.subr.mxu0 0.0
        %426 = vmatpush2.msra.mxu0 0.0
        %427 = vmatprep.subr.mxu0 0.0
        %428 = vmatpush2.msra.mxu0 0.0
        %429 = vmatprep.subr.mxu0 0.0
        %430 = vmatpush2.msra.mxu0 0.0
        %431 = vmatprep.subr.mxu0 0.0
        %432 = vmatpush2.msra.mxu0 0.0
        %433 = vmatprep.subr.mxu0 0.0
        %434 = vmatpush2.msra.mxu0 0.0
        %435 = vmatprep.subr.mxu0 0.0
        %436 = vmatpush2.msra.mxu0 0.0
        %437 = vmatprep.subr.mxu0 0.0
        %438 = vmatpush2.msra.mxu0 0.0
        %439 = vmatprep.subr.mxu0 0.0
        %440 = vmatpush2.msra.mxu0 0.0
        %441 = vmatprep.subr.mxu0 0.0
        %442 = vmatpush2.msra.mxu0 0.0
        %443 = vmatprep.subr.mxu0 0.0
        %444 = vmatpush2.msra.mxu0 0.0
        %445 = vmatprep.subr.mxu0 0.0
        %446 = vmatpush2.msra.mxu0 0.0
        %447 = vmatprep.mubr.f32.mxu0 0.0
        %448 = vmatmul.mubr.f32.gmra.mxu0 %v381
        %v449 = vpop.f32.mrf.mxu0
        %v450 = vadd.f32 0.0, %v449
        %v451 = vpop.f32.mrf.mxu0
        %452 = vdwg.mxu0
        %s453 = smul.u32 %s29, 4
        %s454 = scalar_lea.vmem [#allocation2], %s453
        %vm455 = vcmask 27648
        %456 = vst.msk [vmem:[%s454] sm:$0xf] %vm455, %v450
        %p457 = scmp.eq.s32.totalorder %s29, 0
        // Predicated region
        $region45: #{tpu_custom_call.1} parent=35 // pred_check
          %p458 = pneg %p457
        $region46: #{tpu_custom_call.1} parent=35 // pred_check_branch
          %460 = sbr.rel (%p458) target = $region48
        $region47: #{tpu_custom_call.1} parent=35 // pred_region
          %v461 = vld [vmem:[#allocation2] sm:$0xf]
          %v462 = vlaneseq
          %v463 = vshrl.u32 %v462, 7
          %v464 = vlaneseq
          %v465 = vand.u32 %v464, 127
          %vm466 = vcmask 1047584
          %467 = vrot.lane.b32.xlu0 %v461, 4
          %v468 = vpop.permute.xlu0 %467
          %v469 = vsel %vm466, %v468, %v461
          %470 = vrot.lane.b32.xlu0 %v469, 4
          %v471 = vpop.permute.xlu0 %470
          %v472 = vsel %vm466, %v471, %v461
          %vm473 = vcmp.eq.s32.totalorder %v465, 0
          %475 = vrot.lane.b32.xlu0 %v472, 125
          %v476 = vpop.permute.xlu0 %475
          %v478 = vsel %vm473, 0.0, %v476
          %v479 = vsub.f32 %v461, %v478
          %vm480 = vcmp.eq.s32.totalorder %v465, 3
          %481 = vrot.lane.b32.xlu0 %v472, 127
          %v482 = vpop.permute.xlu0 %481
          %v484 = vsel %vm480, 0.0, %v482
          %v485 = vsub.f32 %v461, %v484
          %vm486 = vcmask 1047556
          %v487 = vrot.slane %v461, 4
          %v488 = vsel %vm486, %v487, %v461
          %v489 = vrot.slane %v488, 4
          %v490 = vsel %vm486, %v489, %v461
          %vm491 = vcmp.eq.s32.totalorder %v463, 0
          %v493 = vrot.slane %v490, 3
          %v495 = vsel %vm491, 0.0, %v493
          %v496 = vsub.f32 %v461, %v495
          %vm497 = vcmp.eq.s32.totalorder %v463, 3
          %v498 = vrot.slane %v490, 1
          %v500 = vsel %vm497, 0.0, %v498
          %v501 = vsub.f32 %v461, %v500
          %v502 = vmul.f32 %v479, %v479
          %v503 = vmul.f32 %v485, %v485
          %v504 = vadd.f32 %v502, %v503
          %v505 = vmul.f32 %v496, %v496
          %v506 = vadd.f32 %v504, %v505
          %v507 = vmul.f32 %v501, %v501
          %v508 = vadd.f32 %v506, %v507
          %509 = vst.msk [vmem:[%s275] sm:$0xf] %vm455, %v508
        $region48: #{tpu_custom_call.1} parent=35 // pred_fallthru
          _
        %s510 = sand.u32 %s142, 1
        %s511 = scalar_lea.sflag [#allocation5], %s510
        %s512 = sand.u32 %s142, 1
        %s513 = smul.addr %s512, 4
        %s514 = scalar_lea.vmem [#allocation8], %s513
        // Predicated region
        $region49: #{tpu_custom_call.1} parent=35 // pred_check
          %p515 = pneg %p152
        $region50: #{tpu_custom_call.1} parent=35 // pred_check_branch
          %517 = sbr.rel (%p515) target = $region52
        $region51: #{tpu_custom_call.1} parent=35 // pred_region
          %s519 = ssub.s32 64, 64
          %520 = vsyncadd %s511, %s519
          %s521 = smul.addr %s28, 64
          %s522 = scalar_lea.hbm %s4, %s521
          %s524 = sshll.u32 %s514, 4
          %s525 = int_to_ptr.vmem [resolvable:$true] %s524
          %527 = dma.vmem_to_hbm [thread:$0]  %s525, 64, %s522, %s511
        $region52: #{tpu_custom_call.1} parent=35 // pred_fallthru
          _
      $region36: #{tpu_custom_call.1} parent=5 // pred_fallthru
        _
      %p528 = scmp.le.s32.totalorder 2, %s19
      // Predicated region
      $region53: #{tpu_custom_call.1} parent=5 // pred_check
        %p529 = pneg %p528
      $region54: #{tpu_custom_call.1} parent=5 // pred_check_branch
        %531 = sbr.rel (%p529) target = $region56
      $region55: #{tpu_custom_call.1} parent=5 // pred_region
        %s532 = ssub.s32 %s19, 2
        // Predicated region
        $region57: #{tpu_custom_call.1} parent=55 // pred_check
          %p533 = pneg %p158
        $region58: #{tpu_custom_call.1} parent=55 // pred_check_branch
          %535 = sbr.rel (%p533) target = $region60
        $region59: #{tpu_custom_call.1} parent=55 // pred_region
          %s536 = sand.u32 %s143, 1
          %s537 = scalar_lea.sflag [#allocation5], %s536
          %s538 = sand.u32 %s143, 1
          %s539 = smul.addr %s538, 4
          %s540 = scalar_lea.vmem [#allocation8], %s539
          %541 = dma.done %s537, 64
        $region60: #{tpu_custom_call.1} parent=55 // pred_fallthru
          _
      $region56: #{tpu_custom_call.1} parent=5 // pred_fallthru
        _
    $region6: #{tpu_custom_call.1} parent=1 // loop_footer
      %s23 = sadd.s32 1, %s19
    $region7: #{tpu_custom_call.1} parent=1 // loop_footer_branch
      %18 = sbr.rel target = $region3
    $region8: #{tpu_custom_call.1} parent=1 // loop_exit
      _
    %542 = vsyncpa [#allocation4], 1
    %s543 = scalar_lea.sflag [#allocation4], 1
    %544 = vsyncpa %s543, 1
    %545 = vsyncpa [#allocation7], 1
    %s546 = scalar_lea.sflag [#allocation7], 1
    %547 = vsyncpa %s546, 1
    %548 = vsyncpa [#allocation5], 1
    %s549 = scalar_lea.sflag [#allocation5], 1
    %550 = vsyncpa %s549, 1

</llo_original>
